<compile_context>
chip_gen: v7x
topology: tpu7x:2x2x1
jax: 0.10.0
libtpu: 0.0.40
codegen_flags: <defaults>
</compile_context>

<pallas_src>
import math

import jax
import jax.numpy as jnp
from jax.experimental import pallas as pl
from jax.experimental.pallas import tpu as pltpu


# Below this element count the fixed pallas_call launch + DMA setup cost
# dominates; let XLA's fused broadcast-add handle it.
_SMALL_ELEMS = 1 << 15  # 32K elements
_DEFAULT_TILE_ROWS = 1024


def _round_up(n: int, m: int) -> int:
    return ((n + m - 1) // m) * m


def _bias_add_kernel(x_ref, b_ref, o_ref):
    # x_ref: (TR, C) tile in VMEM; b_ref: (1, C) bias row, broadcast over
    # sublanes by the VPU add.
    o_ref[...] = (x_ref[...] + b_ref[...]).astype(o_ref.dtype)


def bias_forward(x, bias, *, tile_rows: int = _DEFAULT_TILE_ROWS,
                 force_pallas: bool = False):
    """Pallas equivalent of Bias.forward.

    x    : jnp.ndarray of shape (..., latent_dim) or None
    bias : jnp.ndarray of shape (latent_dim,)
    """
    if x is None:
        return bias

    latent_dim = bias.shape[0]
    assert x.shape[-1] == latent_dim, "last dim of x must equal latent_dim"

    orig_shape = x.shape
    rows = math.prod(orig_shape[:-1]) if len(orig_shape) > 1 else 1

    # Tiny inputs: a custom kernel cannot beat XLA's fused broadcast-add.
    if not force_pallas and rows * latent_dim < _SMALL_ELEMS:
        return x + bias

    # ---- choose layout --------------------------------------------------
    if latent_dim <= 128 and 128 % latent_dim == 0:
        # Lane-dense path: fold `fold` consecutive rows into the 128 lanes.
        fold = 128 // latent_dim
        lanes = 128
        b_op = jnp.tile(bias, fold).reshape(1, lanes).astype(x.dtype)
    else:
        # Fallback: keep (rows, D); block last dim equals the full array dim.
        fold = 1
        lanes = latent_dim
        b_op = bias.reshape(1, lanes).astype(x.dtype)

    x2d = x.reshape(rows, latent_dim)

    # Folded row count before padding, tile size, and padded row counts.
    nrows_exact = -(-rows // fold)                       # cdiv(rows, fold)
    tr = min(tile_rows, _round_up(nrows_exact, 8))       # multiple of 8
    nrows = _round_up(nrows_exact, tr)                   # multiple of tr
    padded_rows = nrows * fold

    if padded_rows != rows:
        x2d = jnp.pad(x2d, ((0, padded_rows - rows), (0, 0)))
    xk = x2d.reshape(nrows, lanes)

    grid = (nrows // tr,)

    out = pl.pallas_call(
        _bias_add_kernel,
        out_shape=jax.ShapeDtypeStruct((nrows, lanes), x.dtype),
        grid=grid,
        in_specs=[
            pl.BlockSpec((tr, lanes), lambda i: (i, 0)),   # streamed tiles
            pl.BlockSpec((1, lanes), lambda i: (0, 0)),    # resident bias row
        ],
        out_specs=pl.BlockSpec((tr, lanes), lambda i: (i, 0)),
        compiler_params=pltpu.CompilerParams(
            dimension_semantics=("parallel",),
        ),
    )(xk, b_op)

    out2d = out.reshape(padded_rows, latent_dim)
    if padded_rows != rows:
        out2d = out2d[:rows]
    return out2d.reshape(orig_shape)


if __name__ == "__main__":
    key = jax.random.PRNGKey(0)
    k_x, k_b, k_big = jax.random.split(key, 3)

    batch, seq, hidden = 2, 8, 32  # latent_dim = 32

    # nn.Parameter(torch.zeros(size)) initializes to zeros; use a small
    # deterministic random bias so the add is non-trivial to verify.
    bias = jax.random.normal(k_b, (hidden,), dtype=jnp.float32) * 0.1
    x_small = jax.random.normal(k_x, (batch, seq, hidden), dtype=jnp.float32)

    # 1) Small shape through the Pallas kernel (forced, exercises lane-dense
    #    folding + row padding at tiny sizes).
    out_small_k = jax.block_until_ready(
        bias_forward(x_small, bias, force_pallas=True))
    ref_small = x_small + bias
    assert out_small_k.shape == x_small.shape
    assert jnp.allclose(out_small_k, ref_small, atol=1e-6, rtol=1e-6)

    # 2) Small shape through the default dispatcher (XLA fallback path).
    out_small = jax.block_until_ready(bias_forward(x_small, bias))
    assert jnp.allclose(out_small, ref_small, atol=1e-6, rtol=1e-6)

    # 3) x is None branch.
    out_none = jax.block_until_ready(bias_forward(None, bias))
    assert out_none.shape == (hidden,)
    assert jnp.allclose(out_none, bias)

    # 4) Larger shape: multi-tile grid, non-divisible row count (tests the
    #    padding + slicing path of the lane-dense layout).
    x_big = jax.random.normal(k_big, (3, 2749, hidden), dtype=jnp.float32)
    out_big = jax.block_until_ready(bias_forward(x_big, bias))
    ref_big = x_big + bias
    assert out_big.shape == x_big.shape
    assert jnp.allclose(out_big, ref_big, atol=1e-6, rtol=1e-6)

    print("KERNEL_OK")
</pallas_src>

<mosaic_0001>
module attributes {stable_mosaic.version = 11 : i64} {
  func.func @_bias_add_kernel(%arg0: i32, %arg1: memref<8x128xf32, #tpu.memory_space<vmem>>, %arg2: memref<1x128xf32, #tpu.memory_space<vmem>>, %arg3: memref<8x128xf32, #tpu.memory_space<vmem>>) attributes {dimension_semantics = [#tpu.dimension_semantics<parallel>], iteration_bounds = array<i64: 1>, scalar_prefetch = 0 : i64, scratch_operands = 0 : i64, tpu.core_type = #tpu.core_type<tc>, window_params = [{transform_indices = @transform_0, window_bounds = array<i64: 8, 128>}, {pipeline_mode = #tpu.pipeline_mode<synchronous>, transform_indices = @transform_1, window_bounds = array<i64: 1, 128>}, {transform_indices = @transform_2, window_bounds = array<i64: 8, 128>}]} {
    %c0 = arith.constant 0 : index
    %c0_0 = arith.constant 0 : index
    %0 = vector.load %arg1[%c0, %c0_0] : memref<8x128xf32, #tpu.memory_space<vmem>>, vector<8x128xf32>
    %c0_1 = arith.constant 0 : index
    %c0_2 = arith.constant 0 : index
    %1 = vector.load %arg2[%c0_1, %c0_2] : memref<1x128xf32, #tpu.memory_space<vmem>>, vector<1x128xf32>
    %2 = vector.broadcast %1 : vector<1x128xf32> to vector<8x128xf32>
    %3 = arith.addf %0, %2 : vector<8x128xf32>
    %c0_3 = arith.constant 0 : index
    %c0_4 = arith.constant 0 : index
    %4 = vector.load %arg3[%c0_3, %c0_4] : memref<8x128xf32, #tpu.memory_space<vmem>>, vector<8x128xf32>
    tpu.vector_store %arg3[%c0_3, %c0_4], %3 {strides = array<i32>} : memref<8x128xf32, #tpu.memory_space<vmem>>, vector<8x128xf32>,
    return
  }
  func.func @transform_0(%arg0: i32) -> (i32, i32) {
    %c0_i32 = arith.constant 0 : i32
    %c0_i32_0 = arith.constant 0 : i32
    return %arg0, %c0_i32 : i32, i32
  }
  func.func @transform_1(%arg0: i32) -> (i32, i32) {
    %c0_i32 = arith.constant 0 : i32
    %c0_i32_0 = arith.constant 0 : i32
    %c0_i32_1 = arith.constant 0 : i32
    return %c0_i32, %c0_i32_0 : i32, i32
  }
  func.func @transform_2(%arg0: i32) -> (i32, i32) {
    %c0_i32 = arith.constant 0 : i32
    %c0_i32_0 = arith.constant 0 : i32
    return %arg0, %c0_i32 : i32, i32
  }
}

</mosaic_0001>

<llo_original>
// kernel: tpu_custom_call.1
$region0: #{tpu_custom_call.1}
  #allocation0 [shape = 'u32[]', space=smem, size = 0x4, offset = 0x4, fixed_abs, tag = 'smem constant byte address 0x4 - core index']
  #allocation1 [shape = 'u32[144,128]{1,0:T(1,128)}', space=vmem, size = 0x12000, scoped, tag = 'internal scratch']
  %s0 = inlined_call_operand.hbm [shape: f32[8,128], index: 0, kind: input, shape index: {}]
  %s1 = inlined_call_operand.vmem [shape: f32[1,128], index: 1, kind: input, shape index: {}]
  %s2 = inlined_call_operand.hbm [shape: f32[8,128], index: 2, kind: output, shape index: {}]
  %s3 = sld [smem:[#allocation0]]
  $region22: #{tpu_custom_call.1} parent=0
    _
  %s5 = ssub.s32 1, %s3
  %s6 = scalar_select 0, %s5, %s3
  $region1: #{tpu_custom_call.1} parent=0
    #allocation2 [shape = 'u8[4096]{0}', space=vmem, size = 0x1000, scoped, tag = 'input window, operand 0, single buffered']
    #allocation3 [shape = 's32[1]{0}', space=sflag, size = 0x4, scoped, tag = 'scoped memory for tpu_custom_call.1']
    #allocation4 [shape = 's32[1]{0}', space=sflag, size = 0x4, scoped, tag = 'scoped memory for tpu_custom_call.1']
    #allocation5 [shape = 'u8[4096]{0}', space=vmem, size = 0x1000, scoped, tag = 'output window, operand 0, single buffered']
    %7 = vsyncpa [#allocation3], 0
    %8 = vsyncpa [#allocation4], 0
    // Predicated region
    $region2: #{tpu_custom_call.1} parent=1 // pred_check
      _
    $region3: #{tpu_custom_call.1} parent=1 // pred_check_branch
      %10 = sbr.rel (0) target = $region5
    $region4: #{tpu_custom_call.1} parent=1 // pred_region
      %s12 = ssub.s32 128, 128
      %13 = vsyncadd [#allocation3], %s12
      %s15 = sshll.u32 [#allocation2], 4
      %s16 = int_to_ptr.vmem [resolvable:$true] %s15
      %18 = dma.hbm_to_vmem [thread:$0]  %s0, 128, %s16, [#allocation3]
    $region5: #{tpu_custom_call.1} parent=1 // pred_fallthru
      _
    // Predicated region
    $region6: #{tpu_custom_call.1} parent=1 // pred_check
      _
    $region7: #{tpu_custom_call.1} parent=1 // pred_check_branch
      %20 = sbr.rel (0) target = $region9
    $region8: #{tpu_custom_call.1} parent=1 // pred_region
      _
    $region9: #{tpu_custom_call.1} parent=1 // pred_fallthru
      _
    // Predicated region
    $region10: #{tpu_custom_call.1} parent=1 // pred_check
      _
    $region11: #{tpu_custom_call.1} parent=1 // pred_check_branch
      %22 = sbr.rel (0) target = $region13
    $region12: #{tpu_custom_call.1} parent=1 // pred_region
      %23 = dma.done [#allocation3], 128
    $region13: #{tpu_custom_call.1} parent=1 // pred_fallthru
      _
    %v24 = vld [vmem:[#allocation2] sm:$0xff]
    %v25 = vld [vmem:[%s1] sm:$0x1]
    %v27 = vlaneseq
    %v28 = vshrl.u32 %v27, 7
    %v29 = vsub.s32 0, %v28
    %v30 = vrot.slane %v25, %v29
    %v32 = vadd.f32 %v24, %v30
    %33 = vst [vmem:[#allocation5] sm:$0xff] %v32
    // Predicated region
    $region14: #{tpu_custom_call.1} parent=1 // pred_check
      _
    $region15: #{tpu_custom_call.1} parent=1 // pred_check_branch
      %35 = sbr.rel (0) target = $region17
    $region16: #{tpu_custom_call.1} parent=1 // pred_region
      %s37 = ssub.s32 128, 128
      %38 = vsyncadd [#allocation4], %s37
      %s40 = sshll.u32 [#allocation5], 4
      %s41 = int_to_ptr.vmem [resolvable:$true] %s40
      %43 = dma.vmem_to_hbm [thread:$0]  %s41, 128, %s2, [#allocation4]
    $region17: #{tpu_custom_call.1} parent=1 // pred_fallthru
      _
    // Predicated region
    $region18: #{tpu_custom_call.1} parent=1 // pred_check
      _
    $region19: #{tpu_custom_call.1} parent=1 // pred_check_branch
      %45 = sbr.rel (0) target = $region21
    $region20: #{tpu_custom_call.1} parent=1 // pred_region
      %46 = dma.done [#allocation4], 128
    $region21: #{tpu_custom_call.1} parent=1 // pred_fallthru
      _
    %47 = vsyncpa [#allocation3], 1
    %48 = vsyncpa [#allocation4], 1

</llo_original>
